<compile_context>
chip_gen: v5e
topology: v5e:2x2
jax: 0.10.0
libtpu: 0.0.40
codegen_flags: <defaults>
</compile_context>

<pallas_src>
import functools
import math

import jax
import jax.numpy as jnp
from jax.experimental import pallas as pl
from jax.experimental.pallas import tpu as pltpu

BN_EPS = 1e-5
VMEM_LIMIT = 48 * 1024 * 1024  # well under v7x's 64 MiB physical VMEM


def _make_divisible(ch, divisor=8, min_ch=None):
    if min_ch is None:
        min_ch = divisor
    new_ch = max(min_ch, int(ch + divisor / 2) // divisor * divisor)
    if new_ch < 0.9 * ch:
        new_ch += divisor
    return new_ch


# ----------------------------------------------------------------------------
# Pallas kernels
# ----------------------------------------------------------------------------
def _vmem_spec():
    return pl.BlockSpec(memory_space=pltpu.MemorySpace.VMEM)


def _mm_bn_act_kernel(x_ref, w_ref, s_ref, b_ref, o_ref, *, act):
    # x: (tm, K) bf16, w: (K, tn) bf16, s/b: (1, tn) f32, o: (tm, tn) bf16
    y = jnp.dot(x_ref[...], w_ref[...], preferred_element_type=jnp.float32)
    y = y * s_ref[...] + b_ref[...]
    if act == "relu6":
        y = jnp.clip(y, 0.0, 6.0)
    o_ref[...] = y.astype(o_ref.dtype)


def _mm_bn_act_res_kernel(x_ref, w_ref, s_ref, b_ref, r_ref, o_ref, *, act):
    # Same as above + fused residual shortcut add (in f32) before the store.
    y = jnp.dot(x_ref[...], w_ref[...], preferred_element_type=jnp.float32)
    y = y * s_ref[...] + b_ref[...]
    if act == "relu6":
        y = jnp.clip(y, 0.0, 6.0)
    y = y + r_ref[...].astype(jnp.float32)
    o_ref[...] = y.astype(o_ref.dtype)


def matmul_bn_act(x, w, scale, bias, act="none", residual=None,
                  out_dtype=jnp.bfloat16):
    """Tiled, pipelined (x @ w) * scale + bias [+ residual] [+ ReLU6]."""
    M, K = x.shape
    N = w.shape[1]
    tm = M if M <= 512 else 512
    if N % 256 == 0:
        tn = 256
    elif N % 128 == 0:
        tn = 128
    else:
        tn = N                               # natural channel count (mult of 8)
    grid = (pl.cdiv(M, tm), N // tn)

    x_spec = pl.BlockSpec((tm, K), lambda i, j: (i, 0))
    w_spec = pl.BlockSpec((K, tn), lambda i, j: (0, j))
    v_spec = pl.BlockSpec((1, tn), lambda i, j: (0, j))
    o_spec = pl.BlockSpec((tm, tn), lambda i, j: (i, j))

    args = [x, w, scale.reshape(1, N), bias.reshape(1, N)]
    in_specs = [x_spec, w_spec, v_spec, v_spec]
    if residual is not None:
        kern = functools.partial(_mm_bn_act_res_kernel, act=act)
        args.append(residual)
        in_specs.append(o_spec)
    else:
        kern = functools.partial(_mm_bn_act_kernel, act=act)

    return pl.pallas_call(
        kern,
        out_shape=jax.ShapeDtypeStruct((M, N), out_dtype),
        grid=grid,
        in_specs=in_specs,
        out_specs=o_spec,
        compiler_params=pltpu.CompilerParams(
            dimension_semantics=("parallel", "parallel"),
            vmem_limit_bytes=VMEM_LIMIT),
    )(*args)


def _dw_s1_kernel(x_ref, w_ref, s_ref, b_ref, o_ref):
    # x: (1, H+2, W+2, C) bf16, w: (9, C) f32, s/b: (1,1,1,C) f32
    _, h, wdim, c = o_ref.shape
    x = x_ref[...].astype(jnp.float32)
    w = w_ref[...]
    acc = jnp.zeros((1, h, wdim, c), jnp.float32)
    # TODO(synk): kw!=0 taps are sublane(W)-axis shifted slices; pltpu.roll on
    # the W axis would move them to the XLU slot.
    for kh in range(3):
        for kw in range(3):
            acc = acc + x[:, kh:kh + h, kw:kw + wdim, :] * \
                w[3 * kh + kw].reshape(1, 1, 1, c)
    y = acc * s_ref[...] + b_ref[...]
    o_ref[...] = jnp.clip(y, 0.0, 6.0).astype(o_ref.dtype)


def _dw_s2_kernel(x_ref, w_ref, s_ref, b_ref, o_ref):
    # x: (4, Ho+1, Wo+1, C) parity planes of the zero-padded input.
    # plane p = 2*(kh%2) + (kw%2); tap (kh,kw) of output (oh,ow) lives at
    # planes[p, oh + kh//2, ow + kw//2].  Only strided outputs are computed.
    _, ho, wo, c = o_ref.shape
    x = x_ref[...].astype(jnp.float32)
    w = w_ref[...]
    acc = jnp.zeros((1, ho, wo, c), jnp.float32)
    for kh in range(3):
        for kw in range(3):
            p = 2 * (kh % 2) + (kw % 2)
            a, b = kh // 2, kw // 2
            acc = acc + x[p:p + 1, a:a + ho, b:b + wo, :] * \
                w[3 * kh + kw].reshape(1, 1, 1, c)
    y = acc * s_ref[...] + b_ref[...]
    o_ref[...] = jnp.clip(y, 0.0, 6.0).astype(o_ref.dtype)


def dwconv3x3_bn_relu6(x, w9c, scale, bias, stride):
    # x: (N, H, W, C) bf16; depthwise 3x3, padding=1, stride in {1, 2}
    n, h, wdim, c = x.shape
    s = scale.reshape(1, 1, 1, c)
    b = bias.reshape(1, 1, 1, c)
    cp = pltpu.CompilerParams(dimension_semantics=("parallel",),
                              vmem_limit_bytes=VMEM_LIMIT)
    xp = jnp.pad(x, ((0, 0), (1, 1), (1, 1), (0, 0)))

    if stride == 1:
        return pl.pallas_call(
            _dw_s1_kernel,
            out_shape=jax.ShapeDtypeStruct((n, h, wdim, c), x.dtype),
            grid=(n,),
            in_specs=[
                pl.BlockSpec((1, h + 2, wdim + 2, c), lambda i: (i, 0, 0, 0)),
                pl.BlockSpec((9, c), lambda i: (0, 0)),
                pl.BlockSpec((1, 1, 1, c), lambda i: (0, 0, 0, 0)),
                pl.BlockSpec((1, 1, 1, c), lambda i: (0, 0, 0, 0)),
            ],
            out_specs=pl.BlockSpec((1, h, wdim, c), lambda i: (i, 0, 0, 0)),
            compiler_params=cp,
        )(xp, w9c, s, b)

    # stride == 2: parity-plane decomposition (computes only strided outputs).
    ho = (h - 1) // 2 + 1
    wo = (wdim - 1) // 2 + 1
    hp2, wp2 = 2 * (ho + 1), 2 * (wo + 1)
    xp = jnp.pad(xp, ((0, 0), (0, hp2 - (h + 2)), (0, wp2 - (wdim + 2)), (0, 0)))
    planes = jnp.stack(
        [xp[:, 0::2, 0::2, :], xp[:, 0::2, 1::2, :],
         xp[:, 1::2, 0::2, :], xp[:, 1::2, 1::2, :]], axis=1)
    planes = planes.reshape(n * 4, ho + 1, wo + 1, c)

    return pl.pallas_call(
        _dw_s2_kernel,
        out_shape=jax.ShapeDtypeStruct((n, ho, wo, c), x.dtype),
        grid=(n,),
        in_specs=[
            pl.BlockSpec((4, ho + 1, wo + 1, c), lambda i: (i, 0, 0, 0)),
            pl.BlockSpec((9, c), lambda i: (0, 0)),
            pl.BlockSpec((1, 1, 1, c), lambda i: (0, 0, 0, 0)),
            pl.BlockSpec((1, 1, 1, c), lambda i: (0, 0, 0, 0)),
        ],
        out_specs=pl.BlockSpec((1, ho, wo, c), lambda i: (i, 0, 0, 0)),
        compiler_params=cp,
    )(planes, w9c, s, b)


def _avgpool_linear_kernel(x_ref, w_ref, b_ref, o_ref):
    # x: (N, H*W, C) bf16, w: (C, num_classes) f32, b: (1, num_classes) f32
    hw = x_ref.shape[1]
    xm = jnp.sum(x_ref[...].astype(jnp.float32), axis=1) * (1.0 / hw)
    o_ref[...] = jnp.dot(xm, w_ref[...],
                         preferred_element_type=jnp.float32) + b_ref[...]


def avgpool_linear(x_nhwc, w, b):
    n, h, wdim, c = x_nhwc.shape
    num_classes = w.shape[1]
    return pl.pallas_call(
        _avgpool_linear_kernel,
        out_shape=jax.ShapeDtypeStruct((n, num_classes), jnp.float32),
        in_specs=[_vmem_spec()] * 3,
        out_specs=_vmem_spec(),
        compiler_params=pltpu.CompilerParams(vmem_limit_bytes=VMEM_LIMIT),
    )(x_nhwc.reshape(n, h * wdim, c), w, b.reshape(1, num_classes))


# ----------------------------------------------------------------------------
# JAX glue: conv wrappers
# ----------------------------------------------------------------------------
def conv1x1_bn_act(x, w, scale, bias, act, residual=None):
    # x: (N, H, W, Cin) bf16, w: (Cin, Cout) bf16
    n, h, wdim, cin = x.shape
    cout = w.shape[1]
    r = None if residual is None else residual.reshape(n * h * wdim, cout)
    y = matmul_bn_act(x.reshape(n * h * wdim, cin), w, scale, bias,
                      act=act, residual=r)
    return y.reshape(n, h, wdim, cout)


def conv3x3_bn_relu6(x, w, scale, bias, stride):
    # standard 3x3 conv, padding=1; w: (32, Cout) bf16 in (kh, kw, cin) order,
    # K zero-padded 27 -> 32 to avoid a ragged MXU contraction.
    # TODO(synk): move im2col into the kernel (halo BlockSpec) to avoid the
    # HBM round-trip of the col array.
    n, h, wdim, cin = x.shape
    cout = w.shape[1]
    xp = jnp.pad(x, ((0, 0), (1, 1), (1, 1), (0, 0)))
    ho = (h + 2 - 3) // stride + 1
    wo = (wdim + 2 - 3) // stride + 1
    patches = []
    for kh in range(3):
        for kw in range(3):
            patches.append(xp[:, kh:kh + stride * ho:stride,
                              kw:kw + stride * wo:stride, :])
    col = jnp.concatenate(patches, axis=-1).reshape(n * ho * wo, 9 * cin)
    col = jnp.pad(col, ((0, 0), (0, w.shape[0] - 9 * cin)))
    y = matmul_bn_act(col, w, scale, bias, act="relu6")
    return y.reshape(n, ho, wo, cout)


# ----------------------------------------------------------------------------
# Parameter construction (deterministic, mimics the PyTorch init distributions)
# ----------------------------------------------------------------------------
def _kaiming_conv(key, out_c, in_c_per_group, kh, kw):
    fan_out = out_c * kh * kw
    std = math.sqrt(2.0 / fan_out)
    return std * jax.random.normal(key, (out_c, in_c_per_group, kh, kw), jnp.float32)


def _bn_scale_bias(c):
    # eval-mode BN with default running stats (mean=0, var=1), gamma=1, beta=0
    scale = jnp.full((c,), 1.0 / math.sqrt(1.0 + BN_EPS), jnp.float32)
    bias = jnp.zeros((c,), jnp.float32)
    return scale, bias


def build_params(key, num_classes=1000, alpha=1.0, round_nearest=8):
    keys = iter(jax.random.split(key, 256))
    input_channel = _make_divisible(32 * alpha, round_nearest)
    last_channel = _make_divisible(1280 * alpha, round_nearest)
    setting = [[1, 16, 1, 1], [6, 24, 2, 2], [6, 32, 3, 2], [6, 64, 4, 2],
               [6, 96, 3, 1], [6, 160, 3, 2], [6, 320, 1, 1]]

    features = []

    # features[0]: ConvBNReLU(3, input_channel, kernel=3, stride=2)
    w0 = _kaiming_conv(next(keys), input_channel, 3, 3, 3)          # (O, I, 3, 3)
    w0 = jnp.transpose(w0, (2, 3, 1, 0)).reshape(9 * 3, input_channel)
    w0 = jnp.pad(w0, ((0, 5), (0, 0))).astype(jnp.bfloat16)         # K: 27 -> 32
    s0, b0 = _bn_scale_bias(input_channel)
    features.append(("conv3x3", dict(w=w0, s=s0, b=b0, stride=2)))

    in_c = input_channel
    for t, c, n, s in setting:
        out_c = _make_divisible(c * alpha, round_nearest)
        for i in range(n):
            stride = s if i == 0 else 1
            hid = in_c * t
            blk = dict(stride=stride, use_shortcut=(stride == 1 and in_c == out_c))
            if t != 1:
                we = _kaiming_conv(next(keys), hid, in_c, 1, 1)      # (hid, in_c, 1, 1)
                blk["expand_w"] = we.reshape(hid, in_c).T.astype(jnp.bfloat16)
                blk["expand_s"], blk["expand_b"] = _bn_scale_bias(hid)
            wd = _kaiming_conv(next(keys), hid, 1, 3, 3)             # depthwise (hid,1,3,3)
            blk["dw_w"] = jnp.transpose(wd, (2, 3, 1, 0)).reshape(9, hid)  # f32
            blk["dw_s"], blk["dw_b"] = _bn_scale_bias(hid)
            wp = _kaiming_conv(next(keys), out_c, hid, 1, 1)         # (out_c, hid, 1, 1)
            blk["pw_w"] = wp.reshape(out_c, hid).T.astype(jnp.bfloat16)
            blk["pw_s"], blk["pw_b"] = _bn_scale_bias(out_c)
            features.append(("block", blk))
            in_c = out_c

    # last ConvBNReLU(in_c, last_channel, kernel=1)
    wl = _kaiming_conv(next(keys), last_channel, in_c, 1, 1)
    sl, bl = _bn_scale_bias(last_channel)
    features.append(("conv1x1",
                     dict(w=wl.reshape(last_channel, in_c).T.astype(jnp.bfloat16),
                          s=sl, b=bl)))

    # classifier: Dropout(0.2) [identity in eval] + Linear(last_channel, num_classes)
    cls_w = 0.01 * jax.random.normal(next(keys), (num_classes, last_channel), jnp.float32)
    cls_b = jnp.zeros((num_classes,), jnp.float32)

    return dict(features=features, cls_w=cls_w.T, cls_b=cls_b)


# ----------------------------------------------------------------------------
# Forward pass
# ----------------------------------------------------------------------------
def forward(params, x_nchw):
    # PyTorch NCHW input -> NHWC bf16 for the kernels
    x = jnp.transpose(x_nchw, (0, 2, 3, 1)).astype(jnp.bfloat16)

    for kind, p in params["features"]:
        if kind == "conv3x3":
            x = conv3x3_bn_relu6(x, p["w"], p["s"], p["b"], p["stride"])
        elif kind == "conv1x1":
            x = conv1x1_bn_act(x, p["w"], p["s"], p["b"], act="relu6")
        else:  # inverted residual block
            # TODO(synk): fuse expand->depthwise->project of one block into a
            # single pallas_call per spatial tile (hidden tensor kept in VMEM).
            y = x
            if "expand_w" in p:
                y = conv1x1_bn_act(y, p["expand_w"], p["expand_s"], p["expand_b"],
                                   act="relu6")
            y = dwconv3x3_bn_relu6(y, p["dw_w"], p["dw_s"], p["dw_b"], p["stride"])
            shortcut = x if p["use_shortcut"] else None
            x = conv1x1_bn_act(y, p["pw_w"], p["pw_s"], p["pw_b"], act="none",
                               residual=shortcut)   # residual add fused in-kernel

    # avgpool -> flatten -> (Dropout: identity in eval) -> Linear, fused kernel
    # TODO(synk): Dropout(0.2) is stochastic in training mode; eval-mode identity used.
    return avgpool_linear(x, params["cls_w"], params["cls_b"])


# ----------------------------------------------------------------------------
if __name__ == "__main__":
    key = jax.random.PRNGKey(0)
    pkey, xkey = jax.random.split(key)

    num_classes = 10            # small head for the demo (constructor argument)
    params = build_params(pkey, num_classes=num_classes)

    # small input consistent with the module: NCHW, 3 channels
    x = jax.random.normal(xkey, (2, 3, 32, 32), jnp.float32)

    out = forward(params, x)
    out = jax.block_until_ready(out)

    assert out.shape == (2, num_classes)
    assert bool(jnp.all(jnp.isfinite(out)))
    print("KERNEL_OK")
</pallas_src>

<mosaic_0001>
module attributes {stable_mosaic.version = 11 : i64} {
  func.func @_mm_bn_act_kernel(%arg0: i32, %arg1: i32, %arg2: memref<512x32xbf16, #tpu.memory_space<vmem>>, %arg3: memref<32x32xbf16, #tpu.memory_space<vmem>>, %arg4: memref<1x32xf32, #tpu.memory_space<vmem>>, %arg5: memref<1x32xf32, #tpu.memory_space<vmem>>, %arg6: memref<512x32xbf16, #tpu.memory_space<vmem>>) attributes {dimension_semantics = [#tpu.dimension_semantics<parallel>, #tpu.dimension_semantics<parallel>], iteration_bounds = array<i64: 1, 1>, scalar_prefetch = 0 : i64, scratch_operands = 0 : i64, tpu.core_type = #tpu.core_type<tc>, window_params = [{transform_indices = @transform_0, window_bounds = array<i64: 512, 32>}, {transform_indices = @transform_1, window_bounds = array<i64: 32, 32>}, {transform_indices = @transform_2, window_bounds = array<i64: 1, 32>}, {transform_indices = @transform_3, window_bounds = array<i64: 1, 32>}, {transform_indices = @transform_4, window_bounds = array<i64: 512, 32>}]} {
    %c0 = arith.constant 0 : index
    %c0_0 = arith.constant 0 : index
    %0 = vector.load %arg2[%c0, %c0_0] : memref<512x32xbf16, #tpu.memory_space<vmem>>, vector<512x32xbf16>
    %c0_1 = arith.constant 0 : index
    %c0_2 = arith.constant 0 : index
    %1 = vector.load %arg3[%c0_1, %c0_2] : memref<32x32xbf16, #tpu.memory_space<vmem>>, vector<32x32xbf16>
    %cst = arith.constant dense<0.000000e+00> : vector<512x32xf32>
    %2 = tpu.matmul %0, %1, %cst {dimension_numbers = #tpu.dot_dimension_numbers<[1], [0], [0], [1], [0, 0, 1, 1], [], []>} : vector<512x32xbf16>, vector<32x32xbf16>, vector<512x32xf32> -> vector<512x32xf32>
    %c0_3 = arith.constant 0 : index
    %c0_4 = arith.constant 0 : index
    %3 = vector.load %arg4[%c0_3, %c0_4] : memref<1x32xf32, #tpu.memory_space<vmem>>, vector<1x32xf32>
    %4 = vector.broadcast %3 : vector<1x32xf32> to vector<512x32xf32>
    %5 = arith.mulf %2, %4 : vector<512x32xf32>
    %c0_5 = arith.constant 0 : index
    %c0_6 = arith.constant 0 : index
    %6 = vector.load %arg5[%c0_5, %c0_6] : memref<1x32xf32, #tpu.memory_space<vmem>>, vector<1x32xf32>
    %7 = vector.broadcast %6 : vector<1x32xf32> to vector<512x32xf32>
    %8 = arith.addf %5, %7 : vector<512x32xf32>
    %cst_7 = arith.constant 0.000000e+00 : f32
    %cst_8 = arith.constant 6.000000e+00 : f32
    %9 = vector.broadcast %cst_7 : f32 to vector<512x32xf32>
    %10 = arith.maximumf %9, %8 : vector<512x32xf32>
    %11 = vector.broadcast %cst_8 : f32 to vector<512x32xf32>
    %12 = arith.minimumf %11, %10 : vector<512x32xf32>
    %13 = arith.truncf %12 : vector<512x32xf32> to vector<512x32xbf16>
    %c0_9 = arith.constant 0 : index
    %c0_10 = arith.constant 0 : index
    %14 = vector.load %arg6[%c0_9, %c0_10] : memref<512x32xbf16, #tpu.memory_space<vmem>>, vector<512x32xbf16>
    tpu.vector_store %arg6[%c0_9, %c0_10], %13 {strides = array<i32>} : memref<512x32xbf16, #tpu.memory_space<vmem>>, vector<512x32xbf16>,
    return
  }
  func.func @transform_0(%arg0: i32, %arg1: i32) -> (i32, i32) {
    %c0_i32 = arith.constant 0 : i32
    %c0_i32_0 = arith.constant 0 : i32
    return %arg0, %c0_i32 : i32, i32
  }
  func.func @transform_1(%arg0: i32, %arg1: i32) -> (i32, i32) {
    %c0_i32 = arith.constant 0 : i32
    %c0_i32_0 = arith.constant 0 : i32
    return %c0_i32, %arg1 : i32, i32
  }
  func.func @transform_2(%arg0: i32, %arg1: i32) -> (i32, i32) {
    %c0_i32 = arith.constant 0 : i32
    %c0_i32_0 = arith.constant 0 : i32
    return %c0_i32, %arg1 : i32, i32
  }
  func.func @transform_3(%arg0: i32, %arg1: i32) -> (i32, i32) {
    %c0_i32 = arith.constant 0 : i32
    %c0_i32_0 = arith.constant 0 : i32
    return %c0_i32, %arg1 : i32, i32
  }
  func.func @transform_4(%arg0: i32, %arg1: i32) -> (i32, i32) {
    %c0_i32 = arith.constant 0 : i32
    return %arg0, %arg1 : i32, i32
  }
}

</mosaic_0001>

<llo_original>
// kernel: tpu_custom_call.1
$region0: #{tpu_custom_call.1}
  #allocation0 [shape = 'u32[]', space=smem, size = 0x4, offset = 0x4, fixed_abs, tag = 'smem constant byte address 0x4 - core index']
  #allocation1 [shape = 'u32[72,128]{1,0:T(1,128)}', space=vmem, size = 0x9000, scoped, tag = 'internal scratch']
  %s0 = inlined_call_operand.vmem [shape: bf16[512,32], index: 0, kind: input, shape index: {}]
  %s1 = inlined_call_operand.vmem [shape: bf16[32,32], index: 1, kind: input, shape index: {}]
  %s2 = inlined_call_operand.vmem [shape: f32[1,32], index: 2, kind: input, shape index: {}]
  %s3 = inlined_call_operand.vmem [shape: f32[1,32], index: 3, kind: input, shape index: {}]
  %s4 = inlined_call_operand.vmem [shape: bf16[512,32], index: 4, kind: output, shape index: {}]
  %s5 = sld [smem:[#allocation0]]
  $region26: #{tpu_custom_call.1} parent=0
    _
  %s7 = ssub.s32 1, %s5
  %s8 = scalar_select 0, %s7, %s5
  // Predicated region
  $region2: #{tpu_custom_call.1} parent=0 // pred_check
    _
  $region3: #{tpu_custom_call.1} parent=0 // pred_check_branch
    %10 = sbr.rel (0) target = $region5
  $region4: #{tpu_custom_call.1} parent=0 // pred_region
    _
  $region5: #{tpu_custom_call.1} parent=0 // pred_fallthru
    _
  // Predicated region
  $region6: #{tpu_custom_call.1} parent=0 // pred_check
    _
  $region7: #{tpu_custom_call.1} parent=0 // pred_check_branch
    %12 = sbr.rel (0) target = $region9
  $region8: #{tpu_custom_call.1} parent=0 // pred_region
    _
  $region9: #{tpu_custom_call.1} parent=0 // pred_fallthru
    _
  // Predicated region
  $region10: #{tpu_custom_call.1} parent=0 // pred_check
    _
  $region11: #{tpu_custom_call.1} parent=0 // pred_check_branch
    %14 = sbr.rel (0) target = $region13
  $region12: #{tpu_custom_call.1} parent=0 // pred_region
    _
  $region13: #{tpu_custom_call.1} parent=0 // pred_fallthru
    _
  // Predicated region
  $region14: #{tpu_custom_call.1} parent=0 // pred_check
    _
  $region15: #{tpu_custom_call.1} parent=0 // pred_check_branch
    %16 = sbr.rel (0) target = $region17
  $region16: #{tpu_custom_call.1} parent=0 // pred_region
    _
  $region17: #{tpu_custom_call.1} parent=0 // pred_fallthru
    _
  %v18 = vld [vmem:[%s0] sm:$0xf]
  %v19 = vld [vmem:[%s0 + $0x4] sm:$0xf]
  %v20 = vld [vmem:[%s0 + $0x8] sm:$0xf]
  %v21 = vld [vmem:[%s0 + $0xc] sm:$0xf]
  %v22 = vld [vmem:[%s0 + $0x10] sm:$0xf]
  %v23 = vld [vmem:[%s0 + $0x14] sm:$0xf]
  %v24 = vld [vmem:[%s0 + $0x18] sm:$0xf]
  %v25 = vld [vmem:[%s0 + $0x1c] sm:$0xf]
  %v26 = vld [vmem:[%s0 + $0x20] sm:$0xf]
  %v27 = vld [vmem:[%s0 + $0x24] sm:$0xf]
  %v28 = vld [vmem:[%s0 + $0x28] sm:$0xf]
  %v29 = vld [vmem:[%s0 + $0x2c] sm:$0xf]
  %v30 = vld [vmem:[%s0 + $0x30] sm:$0xf]
  %v31 = vld [vmem:[%s0 + $0x34] sm:$0xf]
  %v32 = vld [vmem:[%s0 + $0x38] sm:$0xf]
  %v33 = vld [vmem:[%s0 + $0x3c] sm:$0xf]
  %v34 = vld [vmem:[%s0 + $0x40] sm:$0xf]
  %v35 = vld [vmem:[%s0 + $0x44] sm:$0xf]
  %v36 = vld [vmem:[%s0 + $0x48] sm:$0xf]
  %v37 = vld [vmem:[%s0 + $0x4c] sm:$0xf]
  %v38 = vld [vmem:[%s0 + $0x50] sm:$0xf]
  %v39 = vld [vmem:[%s0 + $0x54] sm:$0xf]
  %v40 = vld [vmem:[%s0 + $0x58] sm:$0xf]
  %v41 = vld [vmem:[%s0 + $0x5c] sm:$0xf]
  %v42 = vld [vmem:[%s0 + $0x60] sm:$0xf]
  %v43 = vld [vmem:[%s0 + $0x64] sm:$0xf]
  %v44 = vld [vmem:[%s0 + $0x68] sm:$0xf]
  %v45 = vld [vmem:[%s0 + $0x6c] sm:$0xf]
  %v46 = vld [vmem:[%s0 + $0x70] sm:$0xf]
  %v47 = vld [vmem:[%s0 + $0x74] sm:$0xf]
  %v48 = vld [vmem:[%s0 + $0x78] sm:$0xf]
  %v49 = vld [vmem:[%s0 + $0x7c] sm:$0xf]
  %v50 = vld [vmem:[%s0 + $0x80] sm:$0xf]
  %v51 = vld [vmem:[%s0 + $0x84] sm:$0xf]
  %v52 = vld [vmem:[%s0 + $0x88] sm:$0xf]
  %v53 = vld [vmem:[%s0 + $0x8c] sm:$0xf]
  %v54 = vld [vmem:[%s0 + $0x90] sm:$0xf]
  %v55 = vld [vmem:[%s0 + $0x94] sm:$0xf]
  %v56 = vld [vmem:[%s0 + $0x98] sm:$0xf]
  %v57 = vld [vmem:[%s0 + $0x9c] sm:$0xf]
  %v58 = vld [vmem:[%s0 + $0xa0] sm:$0xf]
  %v59 = vld [vmem:[%s0 + $0xa4] sm:$0xf]
  %v60 = vld [vmem:[%s0 + $0xa8] sm:$0xf]
  %v61 = vld [vmem:[%s0 + $0xac] sm:$0xf]
  %v62 = vld [vmem:[%s0 + $0xb0] sm:$0xf]
  %v63 = vld [vmem:[%s0 + $0xb4] sm:$0xf]
  %v64 = vld [vmem:[%s0 + $0xb8] sm:$0xf]
  %v65 = vld [vmem:[%s0 + $0xbc] sm:$0xf]
  %v66 = vld [vmem:[%s0 + $0xc0] sm:$0xf]
  %v67 = vld [vmem:[%s0 + $0xc4] sm:$0xf]
  %v68 = vld [vmem:[%s0 + $0xc8] sm:$0xf]
  %v69 = vld [vmem:[%s0 + $0xcc] sm:$0xf]
  %v70 = vld [vmem:[%s0 + $0xd0] sm:$0xf]
  %v71 = vld [vmem:[%s0 + $0xd4] sm:$0xf]
  %v72 = vld [vmem:[%s0 + $0xd8] sm:$0xf]
  %v73 = vld [vmem:[%s0 + $0xdc] sm:$0xf]
  %v74 = vld [vmem:[%s0 + $0xe0] sm:$0xf]
  %v75 = vld [vmem:[%s0 + $0xe4] sm:$0xf]
  %v76 = vld [vmem:[%s0 + $0xe8] sm:$0xf]
  %v77 = vld [vmem:[%s0 + $0xec] sm:$0xf]
  %v78 = vld [vmem:[%s0 + $0xf0] sm:$0xf]
  %v79 = vld [vmem:[%s0 + $0xf4] sm:$0xf]
  %v80 = vld [vmem:[%s0 + $0xf8] sm:$0xf]
  %v81 = vld [vmem:[%s0 + $0xfc] sm:$0xf]
  %v82 = vld [vmem:[%s1] sm:$0xf]
  %v83 = vld [vmem:[%s1 + $0x4] sm:$0xf]
  %v84 = vld [vmem:[%s1 + $0x8] sm:$0xf]
  %v85 = vld [vmem:[%s1 + $0xc] sm:$0xf]
  %v150 = vunpack.c.l.b16 %v18
  %v151 = vunpack.c.l.b16 %v19
  %v152 = vunpack.c.l.b16 %v20
  %v153 = vunpack.c.l.b16 %v21
  %v154 = vunpack.c.l.b16 %v22
  %v155 = vunpack.c.l.b16 %v23
  %v156 = vunpack.c.l.b16 %v24
  %v157 = vunpack.c.l.b16 %v25
  %v158 = vunpack.c.l.b16 %v26
  %v159 = vunpack.c.l.b16 %v27
  %v160 = vunpack.c.l.b16 %v28
  %v161 = vunpack.c.l.b16 %v29
  %v162 = vunpack.c.l.b16 %v30
  %v163 = vunpack.c.l.b16 %v31
  %v164 = vunpack.c.l.b16 %v32
  %v165 = vunpack.c.l.b16 %v33
  %v166 = vunpack.c.l.b16 %v34
  %v167 = vunpack.c.l.b16 %v35
  %v168 = vunpack.c.l.b16 %v36
  %v169 = vunpack.c.l.b16 %v37
  %v170 = vunpack.c.l.b16 %v38
  %v171 = vunpack.c.l.b16 %v39
  %v172 = vunpack.c.l.b16 %v40
  %v173 = vunpack.c.l.b16 %v41
  %v174 = vunpack.c.l.b16 %v42
  %v175 = vunpack.c.l.b16 %v43
  %v176 = vunpack.c.l.b16 %v44
  %v177 = vunpack.c.l.b16 %v45
  %v178 = vunpack.c.l.b16 %v46
  %v179 = vunpack.c.l.b16 %v47
  %v180 = vunpack.c.l.b16 %v48
  %v181 = vunpack.c.l.b16 %v49
  %v182 = vunpack.c.l.b16 %v50
  %v183 = vunpack.c.l.b16 %v51
  %v184 = vunpack.c.l.b16 %v52
  %v185 = vunpack.c.l.b16 %v53
  %v186 = vunpack.c.l.b16 %v54
  %v187 = vunpack.c.l.b16 %v55
  %v188 = vunpack.c.l.b16 %v56
  %v189 = vunpack.c.l.b16 %v57
  %v190 = vunpack.c.l.b16 %v58
  %v191 = vunpack.c.l.b16 %v59
  %v192 = vunpack.c.l.b16 %v60
  %v193 = vunpack.c.l.b16 %v61
  %v194 = vunpack.c.l.b16 %v62
  %v195 = vunpack.c.l.b16 %v63
  %v196 = vunpack.c.l.b16 %v64
  %v197 = vunpack.c.l.b16 %v65
  %v198 = vunpack.c.l.b16 %v66
  %v199 = vunpack.c.l.b16 %v67
  %v200 = vunpack.c.l.b16 %v68
  %v201 = vunpack.c.l.b16 %v69
  %v202 = vunpack.c.l.b16 %v70
  %v203 = vunpack.c.l.b16 %v71
  %v204 = vunpack.c.l.b16 %v72
  %v205 = vunpack.c.l.b16 %v73
  %v206 = vunpack.c.l.b16 %v74
  %v207 = vunpack.c.l.b16 %v75
  %v208 = vunpack.c.l.b16 %v76
  %v209 = vunpack.c.l.b16 %v77
  %v210 = vunpack.c.l.b16 %v78
  %v211 = vunpack.c.l.b16 %v79
  %v212 = vunpack.c.l.b16 %v80
  %v213 = vunpack.c.l.b16 %v81
  %v214 = vpack.c.b16 %v151, %v150
  %v215 = vpack.c.b16 %v153, %v152
  %v216 = vpack.c.b16 %v155, %v154
  %v217 = vpack.c.b16 %v157, %v156
  %v218 = vpack.c.b16 %v159, %v158
  %v219 = vpack.c.b16 %v161, %v160
  %v220 = vpack.c.b16 %v163, %v162
  %v221 = vpack.c.b16 %v165, %v164
  %v222 = vpack.c.b16 %v167, %v166
  %v223 = vpack.c.b16 %v169, %v168
  %v224 = vpack.c.b16 %v171, %v170
  %v225 = vpack.c.b16 %v173, %v172
  %v226 = vpack.c.b16 %v175, %v174
  %v227 = vpack.c.b16 %v177, %v176
  %v228 = vpack.c.b16 %v179, %v178
  %v229 = vpack.c.b16 %v181, %v180
  %v230 = vpack.c.b16 %v183, %v182
  %v231 = vpack.c.b16 %v185, %v184
  %v232 = vpack.c.b16 %v187, %v186
  %v233 = vpack.c.b16 %v189, %v188
  %v234 = vpack.c.b16 %v191, %v190
  %v235 = vpack.c.b16 %v193, %v192
  %v236 = vpack.c.b16 %v195, %v194
  %v237 = vpack.c.b16 %v197, %v196
  %v238 = vpack.c.b16 %v199, %v198
  %v239 = vpack.c.b16 %v201, %v200
  %v240 = vpack.c.b16 %v203, %v202
  %v241 = vpack.c.b16 %v205, %v204
  %v242 = vpack.c.b16 %v207, %v206
  %v243 = vpack.c.b16 %v209, %v208
  %v244 = vpack.c.b16 %v211, %v210
  %v245 = vpack.c.b16 %v213, %v212
  %v250 = vunpack.c.l.b16 %v82
  %v251 = vunpack.c.l.b16 %v83
  %v252 = vunpack.c.l.b16 %v84
  %v253 = vunpack.c.l.b16 %v85
  %v254 = vpack.c.b16 %v251, %v250
  %v255 = vpack.c.b16 %v253, %v252
  %vm258 = vcmask 261120
  %v260 = vsel %vm258, %v214, 0
  %v263 = vsel %vm258, %v215, 0
  %v266 = vsel %vm258, %v216, 0
  %v269 = vsel %vm258, %v217, 0
  %v272 = vsel %vm258, %v218, 0
  %v275 = vsel %vm258, %v219, 0
  %v278 = vsel %vm258, %v220, 0
  %v281 = vsel %vm258, %v221, 0
  %v284 = vsel %vm258, %v222, 0
  %v287 = vsel %vm258, %v223, 0
  %v290 = vsel %vm258, %v224, 0
  %v293 = vsel %vm258, %v225, 0
  %v296 = vsel %vm258, %v226, 0
  %v299 = vsel %vm258, %v227, 0
  %v302 = vsel %vm258, %v228, 0
  %v305 = vsel %vm258, %v229, 0
  %v308 = vsel %vm258, %v230, 0
  %v311 = vsel %vm258, %v231, 0
  %v314 = vsel %vm258, %v232, 0
  %v317 = vsel %vm258, %v233, 0
  %v320 = vsel %vm258, %v234, 0
  %v323 = vsel %vm258, %v235, 0
  %v326 = vsel %vm258, %v236, 0
  %v329 = vsel %vm258, %v237, 0
  %v332 = vsel %vm258, %v238, 0
  %v335 = vsel %vm258, %v239, 0
  %v338 = vsel %vm258, %v240, 0
  %v341 = vsel %vm258, %v241, 0
  %v344 = vsel %vm258, %v242, 0
  %v347 = vsel %vm258, %v243, 0
  %v350 = vsel %vm258, %v244, 0
  %v353 = vsel %vm258, %v245, 0
  %355 = vmatpush.bf16.msra.mxu0 0
  %356 = vmatpush.bf16.msra.mxu0 0
  %357 = vmatpush.bf16.msra.mxu0 0
  %358 = vmatpush.bf16.msra.mxu0 0
  %359 = vmatpush.bf16.msra.mxu0 0
  %360 = vmatpush.bf16.msra.mxu0 0
  %361 = vmatpush.bf16.msra.mxu0 %v255
  %362 = vmatpush.bf16.msra.mxu0 %v254
  %363 = vmatmul.bf16.gmra.mxu0 %v260
  %v364 = vpop.f32.mrf.mxu0
  %v365 = vadd.f32 0.0, %v364
  %v366 = vpop.f32.mrf.mxu0
  %v367 = vadd.f32 0.0, %v366
  %368 = vmatmul.bf16.gmra.mxu0 %v263
  %v369 = vpop.f32.mrf.mxu0
  %v370 = vadd.f32 0.0, %v369
  %v371 = vpop.f32.mrf.mxu0
  %v372 = vadd.f32 0.0, %v371
  %373 = vmatmul.bf16.gmra.mxu0 %v266
  %v374 = vpop.f32.mrf.mxu0
  %v375 = vadd.f32 0.0, %v374
  %v376 = vpop.f32.mrf.mxu0
  %v377 = vadd.f32 0.0, %v376
  %378 = vmatmul.bf16.gmra.mxu0 %v269
  %v379 = vpop.f32.mrf.mxu0
  %v380 = vadd.f32 0.0, %v379
  %v381 = vpop.f32.mrf.mxu0
  %v382 = vadd.f32 0.0, %v381
  %383 = vmatmul.bf16.gmra.mxu0 %v272
  %v384 = vpop.f32.mrf.mxu0
  %v385 = vadd.f32 0.0, %v384
  %v386 = vpop.f32.mrf.mxu0
  %v387 = vadd.f32 0.0, %v386
  %388 = vmatmul.bf16.gmra.mxu0 %v275
  %v389 = vpop.f32.mrf.mxu0
  %v390 = vadd.f32 0.0, %v389
  %v391 = vpop.f32.mrf.mxu0
  %v392 = vadd.f32 0.0, %v391
  %393 = vmatmul.bf16.gmra.mxu0 %v278
  %v394 = vpop.f32.mrf.mxu0
  %v395 = vadd.f32 0.0, %v394
  %v396 = vpop.f32.mrf.mxu0
  %v397 = vadd.f32 0.0, %v396
  %398 = vmatmul.bf16.gmra.mxu0 %v281
  %v399 = vpop.f32.mrf.mxu0
  %v400 = vadd.f32 0.0, %v399
  %v401 = vpop.f32.mrf.mxu0
  %v402 = vadd.f32 0.0, %v401
  %403 = vmatmul.bf16.gmra.mxu0 %v284
  %v404 = vpop.f32.mrf.mxu0
  %v405 = vadd.f32 0.0, %v404
  %v406 = vpop.f32.mrf.mxu0
  %v407 = vadd.f32 0.0, %v406
  %408 = vmatmul.bf16.gmra.mxu0 %v287
  %v409 = vpop.f32.mrf.mxu0
  %v410 = vadd.f32 0.0, %v409
  %v411 = vpop.f32.mrf.mxu0
  %v412 = vadd.f32 0.0, %v411
  %413 = vmatmul.bf16.gmra.mxu0 %v290
  %v414 = vpop.f32.mrf.mxu0
  %v415 = vadd.f32 0.0, %v414
  %v416 = vpop.f32.mrf.mxu0
  %v417 = vadd.f32 0.0, %v416
  %418 = vmatmul.bf16.gmra.mxu0 %v293
  %v419 = vpop.f32.mrf.mxu0
  %v420 = vadd.f32 0.0, %v419
  %v421 = vpop.f32.mrf.mxu0
  %v422 = vadd.f32 0.0, %v421
  %423 = vmatmul.bf16.gmra.mxu0 %v296
  %v424 = vpop.f32.mrf.mxu0
  %v425 = vadd.f32 0.0, %v424
  %v426 = vpop.f32.mrf.mxu0
  %v427 = vadd.f32 0.0, %v426
  %428 = vmatmul.bf16.gmra.mxu0 %v299
  %v429 = vpop.f32.mrf.mxu0
  %v430 = vadd.f32 0.0, %v429
  %v431 = vpop.f32.mrf.mxu0
  %v432 = vadd.f32 0.0, %v431
  %433 = vmatmul.bf16.gmra.mxu0 %v302
  %v434 = vpop.f32.mrf.mxu0
  %v435 = vadd.f32 0.0, %v434
  %v436 = vpop.f32.mrf.mxu0
  %v437 = vadd.f32 0.0, %v436
  %438 = vmatmul.bf16.gmra.mxu0 %v305
  %v439 = vpop.f32.mrf.mxu0
  %v440 = vadd.f32 0.0, %v439
  %v441 = vpop.f32.mrf.mxu0
  %v442 = vadd.f32 0.0, %v441
  %443 = vmatmul.bf16.gmra.mxu0 %v308
  %v444 = vpop.f32.mrf.mxu0
  %v445 = vadd.f32 0.0, %v444
  %v446 = vpop.f32.mrf.mxu0
  %v447 = vadd.f32 0.0, %v446
  %448 = vmatmul.bf16.gmra.mxu0 %v311
  %v449 = vpop.f32.mrf.mxu0
  %v450 = vadd.f32 0.0, %v449
  %v451 = vpop.f32.mrf.mxu0
  %v452 = vadd.f32 0.0, %v451
  %453 = vmatmul.bf16.gmra.mxu0 %v314
  %v454 = vpop.f32.mrf.mxu0
  %v455 = vadd.f32 0.0, %v454
  %v456 = vpop.f32.mrf.mxu0
  %v457 = vadd.f32 0.0, %v456
  %458 = vmatmul.bf16.gmra.mxu0 %v317
  %v459 = vpop.f32.mrf.mxu0
  %v460 = vadd.f32 0.0, %v459
  %v461 = vpop.f32.mrf.mxu0
  %v462 = vadd.f32 0.0, %v461
  %463 = vmatmul.bf16.gmra.mxu0 %v320
  %v464 = vpop.f32.mrf.mxu0
  %v465 = vadd.f32 0.0, %v464
  %v466 = vpop.f32.mrf.mxu0
  %v467 = vadd.f32 0.0, %v466
  %468 = vmatmul.bf16.gmra.mxu0 %v323
  %v469 = vpop.f32.mrf.mxu0
  %v470 = vadd.f32 0.0, %v469
  %v471 = vpop.f32.mrf.mxu0
  %v472 = vadd.f32 0.0, %v471
  %473 = vmatmul.bf16.gmra.mxu0 %v326
  %v474 = vpop.f32.mrf.mxu0
  %v475 = vadd.f32 0.0, %v474
  %v476 = vpop.f32.mrf.mxu0
  %v477 = vadd.f32 0.0, %v476
  %478 = vmatmul.bf16.gmra.mxu0 %v329
  %v479 = vpop.f32.mrf.mxu0
  %v480 = vadd.f32 0.0, %v479
  %v481 = vpop.f32.mrf.mxu0
  %v482 = vadd.f32 0.0, %v481
  %483 = vmatmul.bf16.gmra.mxu0 %v332
  %v484 = vpop.f32.mrf.mxu0
  %v485 = vadd.f32 0.0, %v484
  %v486 = vpop.f32.mrf.mxu0
  %v487 = vadd.f32 0.0, %v486
  %488 = vmatmul.bf16.gmra.mxu0 %v335
  %v489 = vpop.f32.mrf.mxu0
  %v490 = vadd.f32 0.0, %v489
  %v491 = vpop.f32.mrf.mxu0
  %v492 = vadd.f32 0.0, %v491
  %493 = vmatmul.bf16.gmra.mxu0 %v338
  %v494 = vpop.f32.mrf.mxu0
  %v495 = vadd.f32 0.0, %v494
  %v496 = vpop.f32.mrf.mxu0
  %v497 = vadd.f32 0.0, %v496
  %498 = vmatmul.bf16.gmra.mxu0 %v341
  %v499 = vpop.f32.mrf.mxu0
  %v500 = vadd.f32 0.0, %v499
  %v501 = vpop.f32.mrf.mxu0
  %v502 = vadd.f32 0.0, %v501
  %503 = vmatmul.bf16.gmra.mxu0 %v344
  %v504 = vpop.f32.mrf.mxu0
  %v505 = vadd.f32 0.0, %v504
  %v506 = vpop.f32.mrf.mxu0
  %v507 = vadd.f32 0.0, %v506
  %508 = vmatmul.bf16.gmra.mxu0 %v347
  %v509 = vpop.f32.mrf.mxu0
  %v510 = vadd.f32 0.0, %v509
  %v511 = vpop.f32.mrf.mxu0
  %v512 = vadd.f32 0.0, %v511
  %513 = vmatmul.bf16.gmra.mxu0 %v350
  %v514 = vpop.f32.mrf.mxu0
  %v515 = vadd.f32 0.0, %v514
  %v516 = vpop.f32.mrf.mxu0
  %v517 = vadd.f32 0.0, %v516
  %518 = vmatmul.bf16.gmra.mxu0 %v353
  %v519 = vpop.f32.mrf.mxu0
  %v520 = vadd.f32 0.0, %v519
  %v521 = vpop.f32.mrf.mxu0
  %v522 = vadd.f32 0.0, %v521
  %523 = vdwg.mxu0
  %v524 = vld [vmem:[%s2] sm:$0x1]
  %v526 = vperm.slane %v524, 0
  %v528 = vmul.f32 %v365, %v526
  %v529 = vmul.f32 %v367, %v526
  %v530 = vmul.f32 %v370, %v526
  %v531 = vmul.f32 %v372, %v526
  %v532 = vmul.f32 %v375, %v526
  %v533 = vmul.f32 %v377, %v526
  %v534 = vmul.f32 %v380, %v526
  %v535 = vmul.f32 %v382, %v526
  %v536 = vmul.f32 %v385, %v526
  %v537 = vmul.f32 %v387, %v526
  %v538 = vmul.f32 %v390, %v526
  %v539 = vmul.f32 %v392, %v526
  %v540 = vmul.f32 %v395, %v526
  %v541 = vmul.f32 %v397, %v526
  %v542 = vmul.f32 %v400, %v526
  %v543 = vmul.f32 %v402, %v526
  %v544 = vmul.f32 %v405, %v526
  %v545 = vmul.f32 %v407, %v526
  %v546 = vmul.f32 %v410, %v526
  %v547 = vmul.f32 %v412, %v526
  %v548 = vmul.f32 %v415, %v526
  %v549 = vmul.f32 %v417, %v526
  %v550 = vmul.f32 %v420, %v526
  %v551 = vmul.f32 %v422, %v526
  %v552 = vmul.f32 %v425, %v526
  %v553 = vmul.f32 %v427, %v526
  %v554 = vmul.f32 %v430, %v526
  %v555 = vmul.f32 %v432, %v526
  %v556 = vmul.f32 %v435, %v526
  %v557 = vmul.f32 %v437, %v526
  %v558 = vmul.f32 %v440, %v526
  %v559 = vmul.f32 %v442, %v526
  %v560 = vmul.f32 %v445, %v526
  %v561 = vmul.f32 %v447, %v526
  %v562 = vmul.f32 %v450, %v526
  %v563 = vmul.f32 %v452, %v526
  %v564 = vmul.f32 %v455, %v526
  %v565 = vmul.f32 %v457, %v526
  %v566 = vmul.f32 %v460, %v526
  %v567 = vmul.f32 %v462, %v526
  %v568 = vmul.f32 %v465, %v526
  %v569 = vmul.f32 %v467, %v526
  %v570 = vmul.f32 %v470, %v526
  %v571 = vmul.f32 %v472, %v526
  %v572 = vmul.f32 %v475, %v526
  %v573 = vmul.f32 %v477, %v526
  %v574 = vmul.f32 %v480, %v526
  %v575 = vmul.f32 %v482, %v526
  %v576 = vmul.f32 %v485, %v526
  %v577 = vmul.f32 %v487, %v526
  %v578 = vmul.f32 %v490, %v526
  %v579 = vmul.f32 %v492, %v526
  %v580 = vmul.f32 %v495, %v526
  %v581 = vmul.f32 %v497, %v526
  %v582 = vmul.f32 %v500, %v526
  %v583 = vmul.f32 %v502, %v526
  %v584 = vmul.f32 %v505, %v526
  %v585 = vmul.f32 %v507, %v526
  %v586 = vmul.f32 %v510, %v526
  %v587 = vmul.f32 %v512, %v526
  %v588 = vmul.f32 %v515, %v526
  %v589 = vmul.f32 %v517, %v526
  %v590 = vmul.f32 %v520, %v526
  %v591 = vmul.f32 %v522, %v526
  %v592 = vld [vmem:[%s3] sm:$0x1]
  %v594 = vperm.slane %v592, 0
  %v596 = vadd.f32 %v528, %v594
  %v597 = vadd.f32 %v529, %v594
  %v598 = vadd.f32 %v530, %v594
  %v599 = vadd.f32 %v531, %v594
  %v600 = vadd.f32 %v532, %v594
  %v601 = vadd.f32 %v533, %v594
  %v602 = vadd.f32 %v534, %v594
  %v603 = vadd.f32 %v535, %v594
  %v604 = vadd.f32 %v536, %v594
  %v605 = vadd.f32 %v537, %v594
  %v606 = vadd.f32 %v538, %v594
  %v607 = vadd.f32 %v539, %v594
  %v608 = vadd.f32 %v540, %v594
  %v609 = vadd.f32 %v541, %v594
  %v610 = vadd.f32 %v542, %v594
  %v611 = vadd.f32 %v543, %v594
  %v612 = vadd.f32 %v544, %v594
  %v613 = vadd.f32 %v545, %v594
  %v614 = vadd.f32 %v546, %v594
  %v615 = vadd.f32 %v547, %v594
  %v616 = vadd.f32 %v548, %v594
  %v617 = vadd.f32 %v549, %v594
  %v618 = vadd.f32 %v550, %v594
  %v619 = vadd.f32 %v551, %v594
  %v620 = vadd.f32 %v552, %v594
  %v621 = vadd.f32 %v553, %v594
  %v622 = vadd.f32 %v554, %v594
  %v623 = vadd.f32 %v555, %v594
  %v624 = vadd.f32 %v556, %v594
  %v625 = vadd.f32 %v557, %v594
  %v626 = vadd.f32 %v558, %v594
  %v627 = vadd.f32 %v559, %v594
  %v628 = vadd.f32 %v560, %v594
  %v629 = vadd.f32 %v561, %v594
  %v630 = vadd.f32 %v562, %v594
  %v631 = vadd.f32 %v563, %v594
  %v632 = vadd.f32 %v564, %v594
  %v633 = vadd.f32 %v565, %v594
  %v634 = vadd.f32 %v566, %v594
  %v635 = vadd.f32 %v567, %v594
  %v636 = vadd.f32 %v568, %v594
  %v637 = vadd.f32 %v569, %v594
  %v638 = vadd.f32 %v570, %v594
  %v639 = vadd.f32 %v571, %v594
  %v640 = vadd.f32 %v572, %v594
  %v641 = vadd.f32 %v573, %v594
  %v642 = vadd.f32 %v574, %v594
  %v643 = vadd.f32 %v575, %v594
  %v644 = vadd.f32 %v576, %v594
  %v645 = vadd.f32 %v577, %v594
  %v646 = vadd.f32 %v578, %v594
  %v647 = vadd.f32 %v579, %v594
  %v648 = vadd.f32 %v580, %v594
  %v649 = vadd.f32 %v581, %v594
  %v650 = vadd.f32 %v582, %v594
  %v651 = vadd.f32 %v583, %v594
  %v652 = vadd.f32 %v584, %v594
  %v653 = vadd.f32 %v585, %v594
  %v654 = vadd.f32 %v586, %v594
  %v655 = vadd.f32 %v587, %v594
  %v656 = vadd.f32 %v588, %v594
  %v657 = vadd.f32 %v589, %v594
  %v658 = vadd.f32 %v590, %v594
  %v659 = vadd.f32 %v591, %v594
  %v660 = vmax.f32 %v596, 0.0
  %v661 = vmax.f32 %v597, 0.0
  %v662 = vmax.f32 %v598, 0.0
  %v663 = vmax.f32 %v599, 0.0
  %v664 = vmax.f32 %v600, 0.0
  %v665 = vmax.f32 %v601, 0.0
  %v666 = vmax.f32 %v602, 0.0
  %v667 = vmax.f32 %v603, 0.0
  %v668 = vmax.f32 %v604, 0.0
  %v669 = vmax.f32 %v605, 0.0
  %v670 = vmax.f32 %v606, 0.0
  %v671 = vmax.f32 %v607, 0.0
  %v672 = vmax.f32 %v608, 0.0
  %v673 = vmax.f32 %v609, 0.0
  %v674 = vmax.f32 %v610, 0.0
  %v675 = vmax.f32 %v611, 0.0
  %v676 = vmax.f32 %v612, 0.0
  %v677 = vmax.f32 %v613, 0.0
  %v678 = vmax.f32 %v614, 0.0
  %v679 = vmax.f32 %v615, 0.0
  %v680 = vmax.f32 %v616, 0.0
  %v681 = vmax.f32 %v617, 0.0
  %v682 = vmax.f32 %v618, 0.0
  %v683 = vmax.f32 %v619, 0.0
  %v684 = vmax.f32 %v620, 0.0
  %v685 = vmax.f32 %v621, 0.0
  %v686 = vmax.f32 %v622, 0.0
  %v687 = vmax.f32 %v623, 0.0
  %v688 = vmax.f32 %v624, 0.0
  %v689 = vmax.f32 %v625, 0.0
  %v690 = vmax.f32 %v626, 0.0
  %v691 = vmax.f32 %v627, 0.0
  %v692 = vmax.f32 %v628, 0.0
  %v693 = vmax.f32 %v629, 0.0
  %v694 = vmax.f32 %v630, 0.0
  %v695 = vmax.f32 %v631, 0.0
  %v696 = vmax.f32 %v632, 0.0
  %v697 = vmax.f32 %v633, 0.0
  %v698 = vmax.f32 %v634, 0.0
  %v699 = vmax.f32 %v635, 0.0
  %v700 = vmax.f32 %v636, 0.0
  %v701 = vmax.f32 %v637, 0.0
  %v702 = vmax.f32 %v638, 0.0
  %v703 = vmax.f32 %v639, 0.0
  %v704 = vmax.f32 %v640, 0.0
  %v705 = vmax.f32 %v641, 0.0
  %v706 = vmax.f32 %v642, 0.0
  %v707 = vmax.f32 %v643, 0.0
  %v708 = vmax.f32 %v644, 0.0
  %v709 = vmax.f32 %v645, 0.0
  %v710 = vmax.f32 %v646, 0.0
  %v711 = vmax.f32 %v647, 0.0
  %v712 = vmax.f32 %v648, 0.0
  %v713 = vmax.f32 %v649, 0.0
  %v714 = vmax.f32 %v650, 0.0
  %v715 = vmax.f32 %v651, 0.0
  %v716 = vmax.f32 %v652, 0.0
  %v717 = vmax.f32 %v653, 0.0
  %v718 = vmax.f32 %v654, 0.0
  %v719 = vmax.f32 %v655, 0.0
  %v720 = vmax.f32 %v656, 0.0
  %v721 = vmax.f32 %v657, 0.0
  %v722 = vmax.f32 %v658, 0.0
  %v723 = vmax.f32 %v659, 0.0
  %v724 = vmin.f32 %v660, 6.0
  %v725 = vmin.f32 %v661, 6.0
  %v726 = vmin.f32 %v662, 6.0
  %v727 = vmin.f32 %v663, 6.0
  %v728 = vmin.f32 %v664, 6.0
  %v729 = vmin.f32 %v665, 6.0
  %v730 = vmin.f32 %v666, 6.0
  %v731 = vmin.f32 %v667, 6.0
  %v732 = vmin.f32 %v668, 6.0
  %v733 = vmin.f32 %v669, 6.0
  %v734 = vmin.f32 %v670, 6.0
  %v735 = vmin.f32 %v671, 6.0
  %v736 = vmin.f32 %v672, 6.0
  %v737 = vmin.f32 %v673, 6.0
  %v738 = vmin.f32 %v674, 6.0
  %v739 = vmin.f32 %v675, 6.0
  %v740 = vmin.f32 %v676, 6.0
  %v741 = vmin.f32 %v677, 6.0
  %v742 = vmin.f32 %v678, 6.0
  %v743 = vmin.f32 %v679, 6.0
  %v744 = vmin.f32 %v680, 6.0
  %v745 = vmin.f32 %v681, 6.0
  %v746 = vmin.f32 %v682, 6.0
  %v747 = vmin.f32 %v683, 6.0
  %v748 = vmin.f32 %v684, 6.0
  %v749 = vmin.f32 %v685, 6.0
  %v750 = vmin.f32 %v686, 6.0
  %v751 = vmin.f32 %v687, 6.0
  %v752 = vmin.f32 %v688, 6.0
  %v753 = vmin.f32 %v689, 6.0
  %v754 = vmin.f32 %v690, 6.0
  %v755 = vmin.f32 %v691, 6.0
  %v756 = vmin.f32 %v692, 6.0
  %v757 = vmin.f32 %v693, 6.0
  %v758 = vmin.f32 %v694, 6.0
  %v759 = vmin.f32 %v695, 6.0
  %v760 = vmin.f32 %v696, 6.0
  %v761 = vmin.f32 %v697, 6.0
  %v762 = vmin.f32 %v698, 6.0
  %v763 = vmin.f32 %v699, 6.0
  %v764 = vmin.f32 %v700, 6.0
  %v765 = vmin.f32 %v701, 6.0
  %v766 = vmin.f32 %v702, 6.0
  %v767 = vmin.f32 %v703, 6.0
  %v768 = vmin.f32 %v704, 6.0
  %v769 = vmin.f32 %v705, 6.0
  %v770 = vmin.f32 %v706, 6.0
  %v771 = vmin.f32 %v707, 6.0
  %v772 = vmin.f32 %v708, 6.0
  %v773 = vmin.f32 %v709, 6.0
  %v774 = vmin.f32 %v710, 6.0
  %v775 = vmin.f32 %v711, 6.0
  %v776 = vmin.f32 %v712, 6.0
  %v777 = vmin.f32 %v713, 6.0
  %v778 = vmin.f32 %v714, 6.0
  %v779 = vmin.f32 %v715, 6.0
  %v780 = vmin.f32 %v716, 6.0
  %v781 = vmin.f32 %v717, 6.0
  %v782 = vmin.f32 %v718, 6.0
  %v783 = vmin.f32 %v719, 6.0
  %v784 = vmin.f32 %v720, 6.0
  %v785 = vmin.f32 %v721, 6.0
  %v786 = vmin.f32 %v722, 6.0
  %v787 = vmin.f32 %v723, 6.0
  %v788 = vpack.c.bf16 %v724, %v724
  %v789 = vpack.c.bf16 %v725, %v725
  %v790 = vpack.c.bf16 %v726, %v726
  %v791 = vpack.c.bf16 %v727, %v727
  %v792 = vpack.c.bf16 %v728, %v728
  %v793 = vpack.c.bf16 %v729, %v729
  %v794 = vpack.c.bf16 %v730, %v730
  %v795 = vpack.c.bf16 %v731, %v731
  %v796 = vpack.c.bf16 %v732, %v732
  %v797 = vpack.c.bf16 %v733, %v733
  %v798 = vpack.c.bf16 %v734, %v734
  %v799 = vpack.c.bf16 %v735, %v735
  %v800 = vpack.c.bf16 %v736, %v736
  %v801 = vpack.c.bf16 %v737, %v737
  %v802 = vpack.c.bf16 %v738, %v738
  %v803 = vpack.c.bf16 %v739, %v739
  %v804 = vpack.c.bf16 %v740, %v740
  %v805 = vpack.c.bf16 %v741, %v741
  %v806 = vpack.c.bf16 %v742, %v742
  %v807 = vpack.c.bf16 %v743, %v743
  %v808 = vpack.c.bf16 %v744, %v744
  %v809 = vpack.c.bf16 %v745, %v745
  %v810 = vpack.c.bf16 %v746, %v746
  %v811 = vpack.c.bf16 %v747, %v747
  %v812 = vpack.c.bf16 %v748, %v748
  %v813 = vpack.c.bf16 %v749, %v749
  %v814 = vpack.c.bf16 %v750, %v750
  %v815 = vpack.c.bf16 %v751, %v751
  %v816 = vpack.c.bf16 %v752, %v752
  %v817 = vpack.c.bf16 %v753, %v753
  %v818 = vpack.c.bf16 %v754, %v754
  %v819 = vpack.c.bf16 %v755, %v755
  %v820 = vpack.c.bf16 %v756, %v756
  %v821 = vpack.c.bf16 %v757, %v757
  %v822 = vpack.c.bf16 %v758, %v758
  %v823 = vpack.c.bf16 %v759, %v759
  %v824 = vpack.c.bf16 %v760, %v760
  %v825 = vpack.c.bf16 %v761, %v761
  %v826 = vpack.c.bf16 %v762, %v762
  %v827 = vpack.c.bf16 %v763, %v763
  %v828 = vpack.c.bf16 %v764, %v764
  %v829 = vpack.c.bf16 %v765, %v765
  %v830 = vpack.c.bf16 %v766, %v766
  %v831 = vpack.c.bf16 %v767, %v767
  %v832 = vpack.c.bf16 %v768, %v768
  %v833 = vpack.c.bf16 %v769, %v769
  %v834 = vpack.c.bf16 %v770, %v770
  %v835 = vpack.c.bf16 %v771, %v771
  %v836 = vpack.c.bf16 %v772, %v772
  %v837 = vpack.c.bf16 %v773, %v773
  %v838 = vpack.c.bf16 %v774, %v774
  %v839 = vpack.c.bf16 %v775, %v775
  %v840 = vpack.c.bf16 %v776, %v776
  %v841 = vpack.c.bf16 %v777, %v777
  %v842 = vpack.c.bf16 %v778, %v778
  %v843 = vpack.c.bf16 %v779, %v779
  %v844 = vpack.c.bf16 %v780, %v780
  %v845 = vpack.c.bf16 %v781, %v781
  %v846 = vpack.c.bf16 %v782, %v782
  %v847 = vpack.c.bf16 %v783, %v783
  %v848 = vpack.c.bf16 %v784, %v784
  %v849 = vpack.c.bf16 %v785, %v785
  %v850 = vpack.c.bf16 %v786, %v786
  %v851 = vpack.c.bf16 %v787, %v787
  %vm852 = vcmask 257024
  %853 = vst.msk [vmem:[%s4] sm:$0xf] %vm852, %v788
  %854 = vst.msk [vmem:[%s4 + $0x4] sm:$0xf] %vm852, %v789
  %855 = vst.msk [vmem:[%s4 + $0x8] sm:$0xf] %vm852, %v790
  %856 = vst.msk [vmem:[%s4 + $0xc] sm:$0xf] %vm852, %v791
  %857 = vst.msk [vmem:[%s4 + $0x10] sm:$0xf] %vm852, %v792
  %858 = vst.msk [vmem:[%s4 + $0x14] sm:$0xf] %vm852, %v793
  %859 = vst.msk [vmem:[%s4 + $0x18] sm:$0xf] %vm852, %v794
  %860 = vst.msk [vmem:[%s4 + $0x1c] sm:$0xf] %vm852, %v795
  %861 = vst.msk [vmem:[%s4 + $0x20] sm:$0xf] %vm852, %v796
  %862 = vst.msk [vmem:[%s4 + $0x24] sm:$0xf] %vm852, %v797
  %863 = vst.msk [vmem:[%s4 + $0x28] sm:$0xf] %vm852, %v798
  %864 = vst.msk [vmem:[%s4 + $0x2c] sm:$0xf] %vm852, %v799
  %865 = vst.msk [vmem:[%s4 + $0x30] sm:$0xf] %vm852, %v800
  %866 = vst.msk [vmem:[%s4 + $0x34] sm:$0xf] %vm852, %v801
  %867 = vst.msk [vmem:[%s4 + $0x38] sm:$0xf] %vm852, %v802
  %868 = vst.msk [vmem:[%s4 + $0x3c] sm:$0xf] %vm852, %v803
  %869 = vst.msk [vmem:[%s4 + $0x40] sm:$0xf] %vm852, %v804
  %870 = vst.msk [vmem:[%s4 + $0x44] sm:$0xf] %vm852, %v805
  %871 = vst.msk [vmem:[%s4 + $0x48] sm:$0xf] %vm852, %v806
  %872 = vst.msk [vmem:[%s4 + $0x4c] sm:$0xf] %vm852, %v807
  %873 = vst.msk [vmem:[%s4 + $0x50] sm:$0xf] %vm852, %v808
  %874 = vst.msk [vmem:[%s4 + $0x54] sm:$0xf] %vm852, %v809
  %875 = vst.msk [vmem:[%s4 + $0x58] sm:$0xf] %vm852, %v810
  %876 = vst.msk [vmem:[%s4 + $0x5c] sm:$0xf] %vm852, %v811
  %877 = vst.msk [vmem:[%s4 + $0x60] sm:$0xf] %vm852, %v812
  %878 = vst.msk [vmem:[%s4 + $0x64] sm:$0xf] %vm852, %v813
  %879 = vst.msk [vmem:[%s4 + $0x68] sm:$0xf] %vm852, %v814
  %880 = vst.msk [vmem:[%s4 + $0x6c] sm:$0xf] %vm852, %v815
  %881 = vst.msk [vmem:[%s4 + $0x70] sm:$0xf] %vm852, %v816
  %882 = vst.msk [vmem:[%s4 + $0x74] sm:$0xf] %vm852, %v817
  %883 = vst.msk [vmem:[%s4 + $0x78] sm:$0xf] %vm852, %v818
  %884 = vst.msk [vmem:[%s4 + $0x7c] sm:$0xf] %vm852, %v819
  %885 = vst.msk [vmem:[%s4 + $0x80] sm:$0xf] %vm852, %v820
  %886 = vst.msk [vmem:[%s4 + $0x84] sm:$0xf] %vm852, %v821
  %887 = vst.msk [vmem:[%s4 + $0x88] sm:$0xf] %vm852, %v822
  %888 = vst.msk [vmem:[%s4 + $0x8c] sm:$0xf] %vm852, %v823
  %889 = vst.msk [vmem:[%s4 + $0x90] sm:$0xf] %vm852, %v824
  %890 = vst.msk [vmem:[%s4 + $0x94] sm:$0xf] %vm852, %v825
  %891 = vst.msk [vmem:[%s4 + $0x98] sm:$0xf] %vm852, %v826
  %892 = vst.msk [vmem:[%s4 + $0x9c] sm:$0xf] %vm852, %v827
  %893 = vst.msk [vmem:[%s4 + $0xa0] sm:$0xf] %vm852, %v828
  %894 = vst.msk [vmem:[%s4 + $0xa4] sm:$0xf] %vm852, %v829
  %895 = vst.msk [vmem:[%s4 + $0xa8] sm:$0xf] %vm852, %v830
  %896 = vst.msk [vmem:[%s4 + $0xac] sm:$0xf] %vm852, %v831
  %897 = vst.msk [vmem:[%s4 + $0xb0] sm:$0xf] %vm852, %v832
  %898 = vst.msk [vmem:[%s4 + $0xb4] sm:$0xf] %vm852, %v833
  %899 = vst.msk [vmem:[%s4 + $0xb8] sm:$0xf] %vm852, %v834
  %900 = vst.msk [vmem:[%s4 + $0xbc] sm:$0xf] %vm852, %v835
  %901 = vst.msk [vmem:[%s4 + $0xc0] sm:$0xf] %vm852, %v836
  %902 = vst.msk [vmem:[%s4 + $0xc4] sm:$0xf] %vm852, %v837
  %903 = vst.msk [vmem:[%s4 + $0xc8] sm:$0xf] %vm852, %v838
  %904 = vst.msk [vmem:[%s4 + $0xcc] sm:$0xf] %vm852, %v839
  %905 = vst.msk [vmem:[%s4 + $0xd0] sm:$0xf] %vm852, %v840
  %906 = vst.msk [vmem:[%s4 + $0xd4] sm:$0xf] %vm852, %v841
  %907 = vst.msk [vmem:[%s4 + $0xd8] sm:$0xf] %vm852, %v842
  %908 = vst.msk [vmem:[%s4 + $0xdc] sm:$0xf] %vm852, %v843
  %909 = vst.msk [vmem:[%s4 + $0xe0] sm:$0xf] %vm852, %v844
  %910 = vst.msk [vmem:[%s4 + $0xe4] sm:$0xf] %vm852, %v845
  %911 = vst.msk [vmem:[%s4 + $0xe8] sm:$0xf] %vm852, %v846
  %912 = vst.msk [vmem:[%s4 + $0xec] sm:$0xf] %vm852, %v847
  %913 = vst.msk [vmem:[%s4 + $0xf0] sm:$0xf] %vm852, %v848
  %914 = vst.msk [vmem:[%s4 + $0xf4] sm:$0xf] %vm852, %v849
  %915 = vst.msk [vmem:[%s4 + $0xf8] sm:$0xf] %vm852, %v850
  %916 = vst.msk [vmem:[%s4 + $0xfc] sm:$0xf] %vm852, %v851
  // Predicated region
  $region18: #{tpu_custom_call.1} parent=0 // pred_check
    _
  $region19: #{tpu_custom_call.1} parent=0 // pred_check_branch
    %918 = sbr.rel (0) target = $region21
  $region20: #{tpu_custom_call.1} parent=0 // pred_region
    _
  $region21: #{tpu_custom_call.1} parent=0 // pred_fallthru
    _
  // Predicated region
  $region22: #{tpu_custom_call.1} parent=0 // pred_check
    _
  $region23: #{tpu_custom_call.1} parent=0 // pred_check_branch
    %920 = sbr.rel (0) target = $region25
  $region24: #{tpu_custom_call.1} parent=0 // pred_region
    _
  $region25: #{tpu_custom_call.1} parent=0 // pred_fallthru
    _

</llo_original>
